<compile_context>
chip_gen: v5e
topology: v5e:2x2
jax: 0.10.0
libtpu: 0.0.40
codegen_flags: <defaults>
</compile_context>

<pallas_src>
import functools
import numpy as np
import jax
import jax.numpy as jnp
from jax.experimental import pallas as pl
from jax.experimental.pallas import tpu as pltpu

# ---------------------------------------------------------------------------
# Config (mirrors NHITSBlock.__init__ arguments)
# ---------------------------------------------------------------------------
INPUT_SIZE = 16                                            # backcast length L
H = 8                                                      # forecast horizon
N_POOL_KERNEL = 2                                          # n_pool_kernel_size
POOLED_SIZE = int(np.ceil(INPUT_SIZE / N_POOL_KERNEL))     # MLP input size P
MLP_LAYERS = 2
MLP_WIDTH = 32
N_THETA = INPUT_SIZE + H                                   # GenericBasis theta
POOLING_MODE = "MaxPool1d"
ACTIVATION = "ReLU"
DROPOUT_PROB = 0.0   # TODO(synk): dropout_prob > 0 would need pltpu.prng_* in-kernel
BATCH = 8

LANE = 128           # vreg / MXU lane width; padded feature width of every layer


def _round_up(x, m):
    return (x + m - 1) // m * m


def _activation(h, name):
    if name == "ReLU":
        return jnp.maximum(h, 0.0)
    if name == "Tanh":
        return jnp.tanh(h)
    if name == "Sigmoid":
        return jax.nn.sigmoid(h)
    if name == "Softplus":
        return jax.nn.softplus(h)
    if name == "LeakyReLU":
        return jnp.where(h > 0, h, 0.01 * h)
    if name == "SELU":
        return jax.nn.selu(h)
    # TODO(synk): PReLU has a learnable slope parameter; not wired in this synthetic kernel
    raise ValueError(name)


# ---------------------------------------------------------------------------
# Kernel
# ---------------------------------------------------------------------------
def nhits_block_kernel(x_ref, w_ref, b_ref, out_ref, *,
                       n_extra_hidden, pooling_mode, activation, p_rows):
    """
    x_ref   : (k, TILE_B, p_rows)  pooling window on the LEADING axis
    w_ref   : (p_rows + n_extra_hidden*128 + 128, 128)  packed, zero-padded weights
              [rows 0:p_rows]   = fused Linear(P->W) o Linear(W->W)
              [next 128-blocks] = remaining hidden Linears (W->W)
              [last 128-block]  = output Linear (W->n_theta)
    b_ref   : (n_extra_hidden + 2, 128)  packed, zero-padded biases
    out_ref : (TILE_B, 128)  lane-dense theta (valid in cols [:N_THETA])
    """
    x = x_ref[...]                                        # (k, TILE_B, p_rows)

    # ---- pooling: reduce over the leading axis -> pure VPU, no relayout ------
    if pooling_mode == "MaxPool1d":
        pooled = jnp.max(x, axis=0)                       # (TILE_B, p_rows)
    else:                                                 # AvgPool1d
        # TODO(synk): AvgPool1d ceil_mode divisor semantics for non-divisible L not reproduced
        pooled = jnp.mean(x, axis=0)

    # ---- fused Linear(P->W) @ Linear(W->W)  (no activation between them) -----
    h = jnp.dot(pooled, w_ref[0:p_rows, :], preferred_element_type=jnp.float32)
    h = h + b_ref[0:1, :]
    h = _activation(h, activation)

    # ---- remaining hidden layers: Linear -> activation ------------------------
    row = p_rows
    for j in range(n_extra_hidden):
        h = jnp.dot(h, w_ref[row:row + LANE, :], preferred_element_type=jnp.float32)
        h = h + b_ref[j + 1:j + 2, :]
        h = _activation(h, activation)
        row += LANE

    # ---- output projection to theta (lane-dense (TILE_B, 128) store) ---------
    theta = jnp.dot(h, w_ref[row:row + LANE, :], preferred_element_type=jnp.float32)
    theta = theta + b_ref[n_extra_hidden + 1:n_extra_hidden + 2, :]
    out_ref[...] = theta.astype(out_ref.dtype)


# ---------------------------------------------------------------------------
# Parameter packing (fusion + lane-dense slabs)
# ---------------------------------------------------------------------------
def pack_params(params):
    """Fuse the first two Linears and pack everything into two 128-wide slabs."""
    assert MLP_WIDTH <= LANE and N_THETA <= LANE
    (w0, b0), (w1, b1), *rest = params
    hidden = rest[:-1]                    # (mlp_layers - 1) Linear(W->W) layers
    wo, bo = rest[-1]

    w0 = w0.astype(jnp.float32)
    w1 = w1.astype(jnp.float32)
    w_fused = w0 @ w1                                     # (P, W)
    b_fused = b0.astype(jnp.float32) @ w1 + b1            # (1, W)

    p_rows = _round_up(POOLED_SIZE, 8)
    n_mm = 2 + len(hidden)                # fused + extra hidden + output matmuls

    blocks = [jnp.zeros((p_rows, LANE), jnp.float32)
              .at[:POOLED_SIZE, :MLP_WIDTH].set(w_fused)]
    for (w, _) in hidden:
        blocks.append(jnp.zeros((LANE, LANE), jnp.float32)
                      .at[:MLP_WIDTH, :MLP_WIDTH].set(w))
    blocks.append(jnp.zeros((LANE, LANE), jnp.float32)
                  .at[:MLP_WIDTH, :N_THETA].set(wo))
    w_slab = jnp.concatenate(blocks, axis=0)              # (p_rows + (n_mm-1)*128, 128)

    b_slab = jnp.zeros((n_mm, LANE), jnp.float32)
    b_slab = b_slab.at[0, :MLP_WIDTH].set(b_fused[0])
    for j, (_, b) in enumerate(hidden):
        b_slab = b_slab.at[j + 1, :MLP_WIDTH].set(b[0])
    b_slab = b_slab.at[n_mm - 1, :N_THETA].set(bo[0])

    return w_slab, b_slab, p_rows


# ---------------------------------------------------------------------------
# Forward wrapper
# ---------------------------------------------------------------------------
def nhits_block_forward(insample_y, w_slab, b_slab, p_rows):
    B, L = insample_y.shape
    k, P = N_POOL_KERNEL, POOLED_SIZE

    y = insample_y.astype(jnp.float32)

    # ceil_mode pooling: pad the tail so L becomes P*k.
    pad_l = P * k - L
    if pad_l:
        pad_val = float("-inf") if POOLING_MODE == "MaxPool1d" else 0.0
        y = jnp.pad(y, ((0, 0), (0, pad_l)), constant_values=pad_val)

    x = y.reshape(B, P, k)
    # phantom pooled positions (multiply by zero weight rows; value just finite)
    if p_rows > P:
        x = jnp.pad(x, ((0, 0), (0, p_rows - P), (0, 0)))

    # batch tiling: grid over batch tiles, parallel across TensorCores (v7x)
    tile_b = min(128, _round_up(B, 8))
    b_pad = _round_up(B, tile_b)
    if b_pad > B:
        x = jnp.pad(x, ((0, b_pad - B), (0, 0), (0, 0)))

    # layout plumbing: pooling window on the LEADING axis -> (k, B_pad, p_rows)
    x = jnp.transpose(x, (2, 0, 1))

    kernel = functools.partial(
        nhits_block_kernel,
        n_extra_hidden=MLP_LAYERS - 1,
        pooling_mode=POOLING_MODE,
        activation=ACTIVATION,
        p_rows=p_rows,
    )

    theta_pad = pl.pallas_call(
        kernel,
        out_shape=jax.ShapeDtypeStruct((b_pad, LANE), jnp.float32),
        grid=(b_pad // tile_b,),
        in_specs=[
            pl.BlockSpec((k, tile_b, p_rows), lambda i: (0, i, 0)),
            pl.BlockSpec(w_slab.shape, lambda i: (0, 0)),   # weights resident
            pl.BlockSpec(b_slab.shape, lambda i: (0, 0)),   # biases resident
        ],
        out_specs=pl.BlockSpec((tile_b, LANE), lambda i: (i, 0)),
        compiler_params=pltpu.CompilerParams(
            dimension_semantics=("parallel",)),
    )(x, w_slab, b_slab)

    theta = theta_pad[:B, :N_THETA]
    return theta[:, :INPUT_SIZE], theta[:, INPUT_SIZE:]


# ---------------------------------------------------------------------------
# Init + pure-JAX reference (unfused, matches the PyTorch module)
# ---------------------------------------------------------------------------
def init_params(key):
    """Deterministic (W, b) pairs for every Linear; W stored as (in, out)."""
    dims = [(POOLED_SIZE, MLP_WIDTH)]
    dims += [(MLP_WIDTH, MLP_WIDTH)] * MLP_LAYERS
    dims += [(MLP_WIDTH, N_THETA)]
    params = []
    for fan_in, fan_out in dims:
        key, kw, kb = jax.random.split(key, 3)
        bound = 1.0 / np.sqrt(fan_in)
        w = jax.random.uniform(kw, (fan_in, fan_out), jnp.float32, -bound, bound)
        b = jax.random.uniform(kb, (1, fan_out), jnp.float32, -bound, bound)
        params.append((w, b))
    return params


def reference_forward(insample_y, params):
    """Pure-JAX reference matching the PyTorch module (eval mode, dropout=0)."""
    B, L = insample_y.shape
    k, P = N_POOL_KERNEL, POOLED_SIZE
    pad = P * k - L
    y = insample_y
    if pad:
        y = jnp.pad(y, ((0, 0), (0, pad)), constant_values=-jnp.inf)
    y = y.reshape(B, P, k)
    pooled = jnp.max(y, axis=-1) if POOLING_MODE == "MaxPool1d" else jnp.mean(y, axis=-1)

    (w0, b0), *hidden, (wo, bo) = params
    h = pooled @ w0 + b0
    for (w, b) in hidden:
        h = jnp.maximum(h @ w + b, 0.0)
    theta = h @ wo + bo
    return theta[:, :INPUT_SIZE], theta[:, INPUT_SIZE:]


if __name__ == "__main__":
    key = jax.random.PRNGKey(0)
    key, kx = jax.random.split(key)
    insample_y = jax.random.normal(kx, (BATCH, INPUT_SIZE), jnp.float32)
    params = init_params(key)

    w_slab, b_slab, p_rows = pack_params(params)
    backcast, forecast = nhits_block_forward(insample_y, w_slab, b_slab, p_rows)
    jax.block_until_ready((backcast, forecast))

    ref_back, ref_fore = reference_forward(insample_y, params)
    assert backcast.shape == (BATCH, INPUT_SIZE) and forecast.shape == (BATCH, H)
    # fused first-two-Linears reassociates the f32 sums -> allow ~1e-4 slack
    np.testing.assert_allclose(np.asarray(backcast), np.asarray(ref_back), rtol=1e-4, atol=1e-4)
    np.testing.assert_allclose(np.asarray(forecast), np.asarray(ref_fore), rtol=1e-4, atol=1e-4)

    print("KERNEL_OK")
</pallas_src>

<mosaic_0001>
module attributes {stable_mosaic.version = 11 : i64} {
  func.func @nhits_block_kernel(%arg0: i32, %arg1: memref<2x8x8xf32, #tpu.memory_space<vmem>>, %arg2: memref<264x128xf32, #tpu.memory_space<vmem>>, %arg3: memref<3x128xf32, #tpu.memory_space<vmem>>, %arg4: memref<8x128xf32, #tpu.memory_space<vmem>>) attributes {dimension_semantics = [#tpu.dimension_semantics<parallel>], iteration_bounds = array<i64: 1>, scalar_prefetch = 0 : i64, scratch_operands = 0 : i64, tpu.core_type = #tpu.core_type<tc>, window_params = [{transform_indices = @transform_0, window_bounds = array<i64: 2, 8, 8>}, {pipeline_mode = #tpu.pipeline_mode<synchronous>, transform_indices = @transform_1, window_bounds = array<i64: 264, 128>}, {pipeline_mode = #tpu.pipeline_mode<synchronous>, transform_indices = @transform_2, window_bounds = array<i64: 3, 128>}, {transform_indices = @transform_3, window_bounds = array<i64: 8, 128>}]} {
    %c0 = arith.constant 0 : index
    %c0_0 = arith.constant 0 : index
    %c0_1 = arith.constant 0 : index
    %0 = vector.load %arg1[%c0, %c0_0, %c0_1] : memref<2x8x8xf32, #tpu.memory_space<vmem>>, vector<2x8x8xf32>
    %cst = arith.constant dense<0xFF800000> : vector<8x8xf32>
    %1 = vector.multi_reduction <maximumf>, %0, %cst [0] : vector<2x8x8xf32> to vector<8x8xf32>
    %c0_2 = arith.constant 0 : index
    %c0_3 = arith.constant 0 : index
    %2 = vector.load %arg2[%c0_2, %c0_3] : memref<264x128xf32, #tpu.memory_space<vmem>>, vector<8x128xf32>
    %cst_4 = arith.constant dense<0.000000e+00> : vector<8x128xf32>
    %3 = tpu.matmul %1, %2, %cst_4 {dimension_numbers = #tpu.dot_dimension_numbers<[1], [0], [0], [1], [0, 0, 1, 1], [], []>} : vector<8x8xf32>, vector<8x128xf32>, vector<8x128xf32> -> vector<8x128xf32>
    %c0_5 = arith.constant 0 : index
    %c0_6 = arith.constant 0 : index
    %4 = vector.load %arg3[%c0_5, %c0_6] : memref<3x128xf32, #tpu.memory_space<vmem>>, vector<1x128xf32>
    %5 = vector.broadcast %4 : vector<1x128xf32> to vector<8x128xf32>
    %6 = arith.addf %3, %5 : vector<8x128xf32>
    %cst_7 = arith.constant 0.000000e+00 : f32
    %7 = vector.broadcast %cst_7 : f32 to vector<8x128xf32>
    %8 = arith.maximumf %6, %7 : vector<8x128xf32>
    %c8 = arith.constant 8 : index
    %c0_8 = arith.constant 0 : index
    %9 = vector.load %arg2[%c8, %c0_8] : memref<264x128xf32, #tpu.memory_space<vmem>>, vector<128x128xf32>
    %cst_9 = arith.constant dense<0.000000e+00> : vector<8x128xf32>
    %10 = tpu.matmul %8, %9, %cst_9 {dimension_numbers = #tpu.dot_dimension_numbers<[1], [0], [0], [1], [0, 0, 1, 1], [], []>} : vector<8x128xf32>, vector<128x128xf32>, vector<8x128xf32> -> vector<8x128xf32>
    %c1 = arith.constant 1 : index
    %c0_10 = arith.constant 0 : index
    %11 = vector.load %arg3[%c1, %c0_10] : memref<3x128xf32, #tpu.memory_space<vmem>>, vector<1x128xf32>
    %12 = vector.broadcast %11 : vector<1x128xf32> to vector<8x128xf32>
    %13 = arith.addf %10, %12 : vector<8x128xf32>
    %cst_11 = arith.constant 0.000000e+00 : f32
    %14 = vector.broadcast %cst_11 : f32 to vector<8x128xf32>
    %15 = arith.maximumf %13, %14 : vector<8x128xf32>
    %c136 = arith.constant 136 : index
    %c0_12 = arith.constant 0 : index
    %16 = vector.load %arg2[%c136, %c0_12] : memref<264x128xf32, #tpu.memory_space<vmem>>, vector<128x128xf32>
    %cst_13 = arith.constant dense<0.000000e+00> : vector<8x128xf32>
    %17 = tpu.matmul %15, %16, %cst_13 {dimension_numbers = #tpu.dot_dimension_numbers<[1], [0], [0], [1], [0, 0, 1, 1], [], []>} : vector<8x128xf32>, vector<128x128xf32>, vector<8x128xf32> -> vector<8x128xf32>
    %c2 = arith.constant 2 : index
    %c0_14 = arith.constant 0 : index
    %18 = vector.load %arg3[%c2, %c0_14] : memref<3x128xf32, #tpu.memory_space<vmem>>, vector<1x128xf32>
    %19 = vector.broadcast %18 : vector<1x128xf32> to vector<8x128xf32>
    %20 = arith.addf %17, %19 : vector<8x128xf32>
    %c0_15 = arith.constant 0 : index
    %c0_16 = arith.constant 0 : index
    %21 = vector.load %arg4[%c0_15, %c0_16] : memref<8x128xf32, #tpu.memory_space<vmem>>, vector<8x128xf32>
    tpu.vector_store %arg4[%c0_15, %c0_16], %20 {strides = array<i32>} : memref<8x128xf32, #tpu.memory_space<vmem>>, vector<8x128xf32>,
    return
  }
  func.func @transform_0(%arg0: i32) -> (i32, i32, i32) {
    %c0_i32 = arith.constant 0 : i32
    %c0_i32_0 = arith.constant 0 : i32
    %c0_i32_1 = arith.constant 0 : i32
    return %c0_i32, %arg0, %c0_i32_0 : i32, i32, i32
  }
  func.func @transform_1(%arg0: i32) -> (i32, i32) {
    %c0_i32 = arith.constant 0 : i32
    %c0_i32_0 = arith.constant 0 : i32
    %c0_i32_1 = arith.constant 0 : i32
    return %c0_i32, %c0_i32_0 : i32, i32
  }
  func.func @transform_2(%arg0: i32) -> (i32, i32) {
    %c0_i32 = arith.constant 0 : i32
    %c0_i32_0 = arith.constant 0 : i32
    %c0_i32_1 = arith.constant 0 : i32
    return %c0_i32, %c0_i32_0 : i32, i32
  }
  func.func @transform_3(%arg0: i32) -> (i32, i32) {
    %c0_i32 = arith.constant 0 : i32
    %c0_i32_0 = arith.constant 0 : i32
    return %arg0, %c0_i32 : i32, i32
  }
}

</mosaic_0001>

<llo_original>
// kernel: tpu_custom_call.1
$region0: #{tpu_custom_call.1}
  #allocation0 [shape = 'u32[]', space=smem, size = 0x4, offset = 0x4, fixed_abs, tag = 'smem constant byte address 0x4 - core index']
  #allocation1 [shape = 'u32[72,128]{1,0:T(1,128)}', space=vmem, size = 0x9000, scoped, tag = 'internal scratch']
  %s0 = inlined_call_operand.hbm [shape: f32[2,8,8], index: 0, kind: input, shape index: {}]
  %s1 = inlined_call_operand.hbm [shape: f32[264,128], index: 1, kind: input, shape index: {}]
  %s2 = inlined_call_operand.hbm [shape: f32[3,128], index: 2, kind: input, shape index: {}]
  %s3 = inlined_call_operand.hbm [shape: f32[8,128], index: 3, kind: output, shape index: {}]
  %s4 = sld [smem:[#allocation0]]
  $region34: #{tpu_custom_call.1} parent=0
    _
  %s6 = ssub.s32 1, %s4
  %s7 = scalar_select 0, %s6, %s4
  $region1: #{tpu_custom_call.1} parent=0
    #allocation2 [shape = 'u8[8192]{0}', space=vmem, size = 0x2000, scoped, tag = 'input window, operand 0, single buffered']
    #allocation3 [shape = 's32[1]{0}', space=sflag, size = 0x4, scoped, tag = 'scoped memory for tpu_custom_call.1']
    #allocation4 [shape = 's32[1]{0}', space=sflag, size = 0x4, scoped, tag = 'scoped memory for tpu_custom_call.1']
    #allocation5 [shape = 'u8[135168]{0}', space=vmem, size = 0x21000, scoped, tag = 'input window, operand 1, single buffered']
    #allocation6 [shape = 's32[1]{0}', space=sflag, size = 0x4, scoped, tag = 'scoped memory for tpu_custom_call.1']
    #allocation7 [shape = 'u8[2048]{0}', space=vmem, size = 0x800, scoped, tag = 'input window, operand 2, single buffered']
    #allocation8 [shape = 'u8[4096]{0}', space=vmem, size = 0x1000, scoped, tag = 'output window, operand 0, single buffered']
    %8 = vsyncpa [#allocation3], 0
    %9 = vsyncpa [#allocation6], 0
    %10 = vsyncpa [#allocation4], 0
    // Predicated region
    $region2: #{tpu_custom_call.1} parent=1 // pred_check
      _
    $region3: #{tpu_custom_call.1} parent=1 // pred_check_branch
      %12 = sbr.rel (0) target = $region5
    $region4: #{tpu_custom_call.1} parent=1 // pred_region
      %14 = vsyncadd [#allocation3], 0
      %s15 = sshll.u32 %s0, 4
      %s16 = int_to_ptr.hbm [resolvable:$true] %s15
      %s17 = sshll.u32 [#allocation2], 4
      %s18 = int_to_ptr.vmem [resolvable:$true] %s17
      %23 = dma.hbm_to_vmem [thread:$0]  %s16, 256, %s18, [#allocation3], 128, 128, 8
    $region5: #{tpu_custom_call.1} parent=1 // pred_fallthru
      _
    // Predicated region
    $region6: #{tpu_custom_call.1} parent=1 // pred_check
      _
    $region7: #{tpu_custom_call.1} parent=1 // pred_check_branch
      %25 = sbr.rel (0) target = $region9
    $region8: #{tpu_custom_call.1} parent=1 // pred_region
      %27 = vsyncadd [#allocation6], 0
      %s28 = sshll.u32 %s1, 4
      %s29 = int_to_ptr.hbm [resolvable:$true] %s28
      %s30 = sshll.u32 [#allocation5], 4
      %s31 = int_to_ptr.vmem [resolvable:$true] %s30
      %36 = dma.hbm_to_vmem [thread:$0]  %s29, 4224, %s31, [#allocation6], 128, 128, 8
    $region9: #{tpu_custom_call.1} parent=1 // pred_fallthru
      _
    // Predicated region
    $region10: #{tpu_custom_call.1} parent=1 // pred_check
      _
    $region11: #{tpu_custom_call.1} parent=1 // pred_check_branch
      %38 = sbr.rel (0) target = $region13
    $region12: #{tpu_custom_call.1} parent=1 // pred_region
      %40 = vsyncadd [#allocation6], 0
      %s42 = sshll.u32 %s2, 4
      %s43 = int_to_ptr.hbm [resolvable:$true] %s42
      %s44 = sshll.u32 [#allocation7], 4
      %s45 = int_to_ptr.vmem [resolvable:$true] %s44
      %47 = dma.hbm_to_vmem [thread:$0]  %s43, 64, %s45, [#allocation6]
    $region13: #{tpu_custom_call.1} parent=1 // pred_fallthru
      _
    // Predicated region
    $region14: #{tpu_custom_call.1} parent=1 // pred_check
      _
    $region15: #{tpu_custom_call.1} parent=1 // pred_check_branch
      %49 = sbr.rel (0) target = $region17
    $region16: #{tpu_custom_call.1} parent=1 // pred_region
      %51 = dma.done [#allocation3], 256
    $region17: #{tpu_custom_call.1} parent=1 // pred_fallthru
      _
    // Predicated region
    $region18: #{tpu_custom_call.1} parent=1 // pred_check
      _
    $region19: #{tpu_custom_call.1} parent=1 // pred_check_branch
      %53 = sbr.rel (0) target = $region21
    $region20: #{tpu_custom_call.1} parent=1 // pred_region
      %55 = dma.done [#allocation6], 4224
    $region21: #{tpu_custom_call.1} parent=1 // pred_fallthru
      _
    // Predicated region
    $region22: #{tpu_custom_call.1} parent=1 // pred_check
      _
    $region23: #{tpu_custom_call.1} parent=1 // pred_check_branch
      %57 = sbr.rel (0) target = $region25
    $region24: #{tpu_custom_call.1} parent=1 // pred_region
      %59 = dma.done [#allocation6], 64
    $region25: #{tpu_custom_call.1} parent=1 // pred_fallthru
      _
    %v60 = vld [vmem:[#allocation2] sm:$0xff]
    %v61 = vld [vmem:[#allocation2 + $0x8] sm:$0xff]
    %vm62 = vcmask 64512
    %v63 = vsel %vm62, %v60, -inf
    %v64 = vsel %vm62, %v61, -inf
    %v65 = vmax.f32 %v63, %v64
    %v66 = vld [vmem:[#allocation5] sm:$0xff]
    %v67 = vld [vmem:[#allocation7] sm:$0x1]
    %v68 = vperm.slane %v67, 0
    %v70 = vsel %vm62, %v65, 0
    %72 = vmatpush.msra.mxu0 0.0
    %73 = vmatpush.msra.mxu0 0.0
    %74 = vmatpush.msra.mxu0 0.0
    %75 = vmatpush.msra.mxu0 0.0
    %76 = vmatpush.msra.mxu0 0.0
    %77 = vmatpush.msra.mxu0 0.0
    %78 = vmatpush.msra.mxu0 0.0
    %79 = vmatpush.msra.mxu0 0.0
    %80 = vmatpush.msra.mxu0 0.0
    %81 = vmatpush.msra.mxu0 0.0
    %82 = vmatpush.msra.mxu0 0.0
    %83 = vmatpush.msra.mxu0 0.0
    %84 = vmatpush.msra.mxu0 0.0
    %85 = vmatpush.msra.mxu0 0.0
    %86 = vmatpush.msra.mxu0 0.0
    %87 = vmatpush.msra.mxu0 %v66
    %88 = vmatmul.f32.gmra.mxu0 %v70
    %v89 = vpop.f32.mrf.mxu0
    %v90 = vadd.f32 %v68, %v89
    %91 = vdwg.mxu0
    %v92 = vmax.f32 %v90, 0.0
    %v93 = vld [vmem:[#allocation5 + $0x8] sm:$0xff]
    %v94 = vld [vmem:[#allocation5 + $0x10] sm:$0xff]
    %v95 = vld [vmem:[#allocation5 + $0x18] sm:$0xff]
    %v96 = vld [vmem:[#allocation5 + $0x20] sm:$0xff]
    %v97 = vld [vmem:[#allocation5 + $0x28] sm:$0xff]
    %v98 = vld [vmem:[#allocation5 + $0x30] sm:$0xff]
    %v99 = vld [vmem:[#allocation5 + $0x38] sm:$0xff]
    %v100 = vld [vmem:[#allocation5 + $0x40] sm:$0xff]
    %v101 = vld [vmem:[#allocation5 + $0x48] sm:$0xff]
    %v102 = vld [vmem:[#allocation5 + $0x50] sm:$0xff]
    %v103 = vld [vmem:[#allocation5 + $0x58] sm:$0xff]
    %v104 = vld [vmem:[#allocation5 + $0x60] sm:$0xff]
    %v105 = vld [vmem:[#allocation5 + $0x68] sm:$0xff]
    %v106 = vld [vmem:[#allocation5 + $0x70] sm:$0xff]
    %v107 = vld [vmem:[#allocation5 + $0x78] sm:$0xff]
    %v108 = vld [vmem:[#allocation5 + $0x80] sm:$0xff]
    %v109 = vld [vmem:[#allocation7 + $0x1] sm:$0x1]
    %v110 = vperm.slane %v109, 0
    %111 = vmatpush.msra.mxu0 %v108
    %112 = vmatpush.msra.mxu0 %v107
    %113 = vmatpush.msra.mxu0 %v106
    %114 = vmatpush.msra.mxu0 %v105
    %115 = vmatpush.msra.mxu0 %v104
    %116 = vmatpush.msra.mxu0 %v103
    %117 = vmatpush.msra.mxu0 %v102
    %118 = vmatpush.msra.mxu0 %v101
    %119 = vmatpush.msra.mxu0 %v100
    %120 = vmatpush.msra.mxu0 %v99
    %121 = vmatpush.msra.mxu0 %v98
    %122 = vmatpush.msra.mxu0 %v97
    %123 = vmatpush.msra.mxu0 %v96
    %124 = vmatpush.msra.mxu0 %v95
    %125 = vmatpush.msra.mxu0 %v94
    %126 = vmatpush.msra.mxu0 %v93
    %127 = vmatmul.f32.gmra.mxu0 %v92
    %v128 = vpop.f32.mrf.mxu0
    %v129 = vadd.f32 %v110, %v128
    %130 = vdwg.mxu0
    %v131 = vmax.f32 %v129, 0.0
    %v132 = vld [vmem:[#allocation5 + $0x88] sm:$0xff]
    %v133 = vld [vmem:[#allocation5 + $0x90] sm:$0xff]
    %v134 = vld [vmem:[#allocation5 + $0x98] sm:$0xff]
    %v135 = vld [vmem:[#allocation5 + $0xa0] sm:$0xff]
    %v136 = vld [vmem:[#allocation5 + $0xa8] sm:$0xff]
    %v137 = vld [vmem:[#allocation5 + $0xb0] sm:$0xff]
    %v138 = vld [vmem:[#allocation5 + $0xb8] sm:$0xff]
    %v139 = vld [vmem:[#allocation5 + $0xc0] sm:$0xff]
    %v140 = vld [vmem:[#allocation5 + $0xc8] sm:$0xff]
    %v141 = vld [vmem:[#allocation5 + $0xd0] sm:$0xff]
    %v142 = vld [vmem:[#allocation5 + $0xd8] sm:$0xff]
    %v143 = vld [vmem:[#allocation5 + $0xe0] sm:$0xff]
    %v144 = vld [vmem:[#allocation5 + $0xe8] sm:$0xff]
    %v145 = vld [vmem:[#allocation5 + $0xf0] sm:$0xff]
    %v146 = vld [vmem:[#allocation5 + $0xf8] sm:$0xff]
    %v147 = vld [vmem:[#allocation5 + $0x100] sm:$0xff]
    %v148 = vld [vmem:[#allocation7 + $0x2] sm:$0x1]
    %v149 = vperm.slane %v148, 0
    %150 = vmatpush.msra.mxu0 %v147
    %151 = vmatpush.msra.mxu0 %v146
    %152 = vmatpush.msra.mxu0 %v145
    %153 = vmatpush.msra.mxu0 %v144
    %154 = vmatpush.msra.mxu0 %v143
    %155 = vmatpush.msra.mxu0 %v142
    %156 = vmatpush.msra.mxu0 %v141
    %157 = vmatpush.msra.mxu0 %v140
    %158 = vmatpush.msra.mxu0 %v139
    %159 = vmatpush.msra.mxu0 %v138
    %160 = vmatpush.msra.mxu0 %v137
    %161 = vmatpush.msra.mxu0 %v136
    %162 = vmatpush.msra.mxu0 %v135
    %163 = vmatpush.msra.mxu0 %v134
    %164 = vmatpush.msra.mxu0 %v133
    %165 = vmatpush.msra.mxu0 %v132
    %166 = vmatmul.f32.gmra.mxu0 %v131
    %v167 = vpop.f32.mrf.mxu0
    %v168 = vadd.f32 %v149, %v167
    %169 = vdwg.mxu0
    %170 = vst [vmem:[#allocation8] sm:$0xff] %v168
    // Predicated region
    $region26: #{tpu_custom_call.1} parent=1 // pred_check
      _
    $region27: #{tpu_custom_call.1} parent=1 // pred_check_branch
      %172 = sbr.rel (0) target = $region29
    $region28: #{tpu_custom_call.1} parent=1 // pred_region
      %174 = vsyncadd [#allocation4], 0
      %s176 = sshll.u32 [#allocation8], 4
      %s177 = int_to_ptr.vmem [resolvable:$true] %s176
      %s178 = sshll.u32 %s3, 4
      %s179 = int_to_ptr.hbm [resolvable:$true] %s178
      %181 = dma.vmem_to_hbm [thread:$0]  %s177, 128, %s179, [#allocation4]
    $region29: #{tpu_custom_call.1} parent=1 // pred_fallthru
      _
    // Predicated region
    $region30: #{tpu_custom_call.1} parent=1 // pred_check
      _
    $region31: #{tpu_custom_call.1} parent=1 // pred_check_branch
      %183 = sbr.rel (0) target = $region33
    $region32: #{tpu_custom_call.1} parent=1 // pred_region
      %185 = dma.done [#allocation4], 128
    $region33: #{tpu_custom_call.1} parent=1 // pred_fallthru
      _
    %186 = vsyncpa [#allocation3], 1
    %187 = vsyncpa [#allocation6], 1
    %188 = vsyncpa [#allocation4], 1

</llo_original>
